<compile_context>
chip_gen: v5e
topology: v5e:2x2
jax: 0.10.0
libtpu: 0.0.40
codegen_flags: <defaults>
</compile_context>

<pallas_src>
import functools

import jax
import jax.numpy as jnp
from jax.experimental import pallas as pl
from jax.experimental.pallas import tpu as pltpu

GNN_HIDDEN = 32   # MultiLayerTimingGNN(3, 32)
GNN_LAYERS = 3
OUT_LANES = 128   # lane-dense padded output width (reward_dim <= 128)


def _mosoftq_kernel(x_ref, a_ref,
                    g0w_ref, g0b_ref, g1w_ref, g1b_ref, g2w_ref, g2b_ref,
                    c0wn_ref, c0wa_ref, c0b_ref,
                    c1w_ref, c1b_ref, c2w_ref, c2b_ref,
                    out_ref):
    rows, _ = x_ref.shape            # rows = TILE_B * N
    tile_b = a_ref.shape[0]
    n_nodes = rows // tile_b

    # ---- GNN node-update stack (3 layers, hidden=32), applied per node ----
    # TODO(synk): DGL edge aggregation / graph message passing of
    # MultiLayerTimingGNN has no Pallas equivalent; only the per-node dense
    # updates are implemented here.
    h = x_ref[...]
    h = jnp.maximum(
        jnp.dot(h, g0w_ref[...], preferred_element_type=jnp.float32) + g0b_ref[...], 0.0)
    h = jnp.maximum(
        jnp.dot(h, g1w_ref[...], preferred_element_type=jnp.float32) + g1b_ref[...], 0.0)
    h = jnp.dot(h, g2w_ref[...], preferred_element_type=jnp.float32) + g2b_ref[...]

    # ---- dgl.mean_nodes(g, 'nf'): mean over the nodes of each graph ----
    nf = jnp.mean(h.reshape(tile_b, n_nodes, GNN_HIDDEN), axis=1)   # [TILE_B, 32]

    # ---- th.cat([nf, a], 1) @ W0  ==  nf @ W0[:32] + a @ W0[32:]  ----
    # (split matmul avoids the 36-lane concat / relayout; bf16 ops, f32 acc)
    q = (jnp.dot(nf.astype(jnp.bfloat16), c0wn_ref[...],
                 preferred_element_type=jnp.float32)
         + jnp.dot(a_ref[...].astype(jnp.bfloat16), c0wa_ref[...],
                   preferred_element_type=jnp.float32)
         + c0b_ref[...])
    q = jnp.maximum(q, 0.0)
    q = jnp.maximum(
        jnp.dot(q.astype(jnp.bfloat16), c1w_ref[...],
                preferred_element_type=jnp.float32) + c1b_ref[...], 0.0)
    q = jnp.dot(q.astype(jnp.bfloat16), c2w_ref[...],
                preferred_element_type=jnp.float32) + c2b_ref[...]

    out_ref[...] = q.astype(out_ref.dtype)   # lane-dense (TILE_B, 128) store


def _const_spec(shape):
    ndim = len(shape)
    return pl.BlockSpec(shape, lambda i: (0,) * ndim)   # resident across grid


@functools.partial(jax.jit, static_argnames=("reward_dim",))
def mosoftq_forward(node_feats, action, params, reward_dim):
    """node_feats: [B, N, F] f32; action: [B, A, 1] f32 (PyTorch layout)."""
    assert reward_dim <= OUT_LANES
    B, N, F = node_feats.shape
    a = jnp.squeeze(action, axis=-1).astype(jnp.float32)   # a.squeeze(-1) -> [B, A]
    A = a.shape[1]

    # ---- batch tiling: amortize per-step overhead, feed the MXU wide tiles ----
    # 128-row tiles keep the v5e 128-wide MXU fully fed and are comfortably
    # inside the v7x 64 MiB VMEM budget at these weight sizes.
    tile_b = B if B <= 128 else 128
    b_pad = pl.cdiv(B, tile_b) * tile_b
    if b_pad != B:
        node_feats = jnp.pad(node_feats, ((0, b_pad - B), (0, 0), (0, 0)))
        a = jnp.pad(a, ((0, b_pad - B), (0, 0)))

    # Flatten (B, N, F) -> (B*N, F) in the wrapper (free layout plumbing).
    x2d = node_feats.reshape(b_pad * N, F).astype(jnp.float32)

    # Critic weights: split W0 (no in-kernel concat), bf16 operands, f32 acc.
    c0w = params["c0w"]
    c0wn = c0w[:GNN_HIDDEN, :].astype(jnp.bfloat16)
    c0wa = c0w[GNN_HIDDEN:, :].astype(jnp.bfloat16)
    c1w = params["c1w"].astype(jnp.bfloat16)
    # Lane-dense output: zero-pad the last layer to 128 output lanes.
    c2w = jnp.pad(params["c2w"],
                  ((0, 0), (0, OUT_LANES - reward_dim))).astype(jnp.bfloat16)
    c2b = jnp.pad(params["c2b"], ((0, 0), (0, OUT_LANES - reward_dim)))

    args = (
        x2d, a,
        params["g0w"], params["g0b"], params["g1w"], params["g1b"],
        params["g2w"], params["g2b"],
        c0wn, c0wa, params["c0b"], c1w, params["c1b"], c2w, c2b,
    )
    in_specs = [
        pl.BlockSpec((tile_b * N, F), lambda i: (i, 0)),   # per-tile node slab
        pl.BlockSpec((tile_b, A), lambda i: (i, 0)),       # per-tile actions
    ] + [_const_spec(w.shape) for w in args[2:]]           # resident weights
    out_spec = pl.BlockSpec((tile_b, OUT_LANES), lambda i: (i, 0))

    q_pad = pl.pallas_call(
        _mosoftq_kernel,
        out_shape=jax.ShapeDtypeStruct((b_pad, OUT_LANES), jnp.float32),
        grid=(b_pad // tile_b,),
        in_specs=in_specs,
        out_specs=out_spec,
        compiler_params=pltpu.CompilerParams(
            dimension_semantics=("parallel",)),
    )(*args)
    return q_pad[:B, :reward_dim]


def _linear_init(key, fan_in, fan_out):
    # PyTorch nn.Linear default: U(-1/sqrt(fan_in), 1/sqrt(fan_in)).
    kw, kb = jax.random.split(key)
    bound = 1.0 / jnp.sqrt(jnp.float32(fan_in))
    w = jax.random.uniform(kw, (fan_in, fan_out), jnp.float32, -bound, bound)
    b = jax.random.uniform(kb, (1, fan_out), jnp.float32, -bound, bound)
    return w, b


def init_params(key, node_feat_dim, action_dim, reward_dim, net_arch=(256, 256)):
    keys = jax.random.split(key, GNN_LAYERS + len(net_arch) + 1)
    params = {}
    # GNN node-update stack: F -> 32 -> 32 -> 32
    dims = [node_feat_dim] + [GNN_HIDDEN] * GNN_LAYERS
    for i in range(GNN_LAYERS):
        w, b = _linear_init(keys[i], dims[i], dims[i + 1])
        params[f"g{i}w"], params[f"g{i}b"] = w, b
    # Critic MLP: (32 + action_dim) -> 256 -> 256 -> reward_dim
    cdims = [GNN_HIDDEN + action_dim] + list(net_arch) + [reward_dim]
    for i in range(len(cdims) - 1):
        w, b = _linear_init(keys[GNN_LAYERS + i], cdims[i], cdims[i + 1])
        params[f"c{i}w"], params[f"c{i}b"] = w, b
    return params


def _reference(node_feats, action, params):
    """Pure-JAX f32 reference of the same forward pass."""
    B, N, F = node_feats.shape
    a = jnp.squeeze(action, axis=-1)
    h = node_feats.reshape(B * N, F)
    h = jnp.maximum(h @ params["g0w"] + params["g0b"], 0.0)
    h = jnp.maximum(h @ params["g1w"] + params["g1b"], 0.0)
    h = h @ params["g2w"] + params["g2b"]
    nf = jnp.mean(h.reshape(B, N, GNN_HIDDEN), axis=1)
    x = jnp.concatenate([nf, a], axis=1)
    q = jnp.maximum(x @ params["c0w"] + params["c0b"], 0.0)
    q = jnp.maximum(q @ params["c1w"] + params["c1b"], 0.0)
    return q @ params["c2w"] + params["c2b"]


if __name__ == "__main__":
    key = jax.random.PRNGKey(0)
    k_p, k_x, k_a = jax.random.split(key, 3)

    B = 2          # batch (number of graphs)
    N = 16         # nodes per graph
    F = 8          # per-node timing feature dim
    ACTION_DIM = 4
    REWARD_DIM = 3

    params = init_params(k_p, F, ACTION_DIM, REWARD_DIM, net_arch=(256, 256))
    node_feats = jax.random.normal(k_x, (B, N, F), jnp.float32)
    action = jax.random.normal(k_a, (B, ACTION_DIM, 1), jnp.float32)  # squeezed in wrapper

    q_values = mosoftq_forward(node_feats, action, params, reward_dim=REWARD_DIM)
    q_values = jax.block_until_ready(q_values)

    assert q_values.shape == (B, REWARD_DIM)
    assert q_values.dtype == jnp.float32

    q_ref = _reference(node_feats, action, params)
    assert jnp.all(jnp.isfinite(q_values))
    # bf16 critic operands with f32 accumulation: generous tolerance.
    assert jnp.allclose(q_values, q_ref, atol=1e-1, rtol=5e-2)

    print("KERNEL_OK")
</pallas_src>

<mosaic_0001>
module attributes {stable_mosaic.version = 11 : i64} {
  func.func @_mosoftq_kernel(%arg0: i32, %arg1: memref<32x8xf32, #tpu.memory_space<vmem>>, %arg2: memref<2x4xf32, #tpu.memory_space<vmem>>, %arg3: memref<8x32xf32, #tpu.memory_space<vmem>>, %arg4: memref<1x32xf32, #tpu.memory_space<vmem>>, %arg5: memref<32x32xf32, #tpu.memory_space<vmem>>, %arg6: memref<1x32xf32, #tpu.memory_space<vmem>>, %arg7: memref<32x32xf32, #tpu.memory_space<vmem>>, %arg8: memref<1x32xf32, #tpu.memory_space<vmem>>, %arg9: memref<32x256xbf16, #tpu.memory_space<vmem>>, %arg10: memref<4x256xbf16, #tpu.memory_space<vmem>>, %arg11: memref<1x256xf32, #tpu.memory_space<vmem>>, %arg12: memref<256x256xbf16, #tpu.memory_space<vmem>>, %arg13: memref<1x256xf32, #tpu.memory_space<vmem>>, %arg14: memref<256x128xbf16, #tpu.memory_space<vmem>>, %arg15: memref<1x128xf32, #tpu.memory_space<vmem>>, %arg16: memref<2x128xf32, #tpu.memory_space<vmem>>) attributes {dimension_semantics = [#tpu.dimension_semantics<parallel>], iteration_bounds = array<i64: 1>, scalar_prefetch = 0 : i64, scratch_operands = 0 : i64, tpu.core_type = #tpu.core_type<tc>, window_params = [{transform_indices = @transform_0, window_bounds = array<i64: 32, 8>}, {transform_indices = @transform_1, window_bounds = array<i64: 2, 4>}, {pipeline_mode = #tpu.pipeline_mode<synchronous>, transform_indices = @transform_2, window_bounds = array<i64: 8, 32>}, {pipeline_mode = #tpu.pipeline_mode<synchronous>, transform_indices = @transform_3, window_bounds = array<i64: 1, 32>}, {pipeline_mode = #tpu.pipeline_mode<synchronous>, transform_indices = @transform_4, window_bounds = array<i64: 32, 32>}, {pipeline_mode = #tpu.pipeline_mode<synchronous>, transform_indices = @transform_5, window_bounds = array<i64: 1, 32>}, {pipeline_mode = #tpu.pipeline_mode<synchronous>, transform_indices = @transform_6, window_bounds = array<i64: 32, 32>}, {pipeline_mode = #tpu.pipeline_mode<synchronous>, transform_indices = @transform_7, window_bounds = array<i64: 1, 32>}, {pipeline_mode = #tpu.pipeline_mode<synchronous>, transform_indices = @transform_8, window_bounds = array<i64: 32, 256>}, {pipeline_mode = #tpu.pipeline_mode<synchronous>, transform_indices = @transform_9, window_bounds = array<i64: 4, 256>}, {pipeline_mode = #tpu.pipeline_mode<synchronous>, transform_indices = @transform_10, window_bounds = array<i64: 1, 256>}, {pipeline_mode = #tpu.pipeline_mode<synchronous>, transform_indices = @transform_11, window_bounds = array<i64: 256, 256>}, {pipeline_mode = #tpu.pipeline_mode<synchronous>, transform_indices = @transform_12, window_bounds = array<i64: 1, 256>}, {pipeline_mode = #tpu.pipeline_mode<synchronous>, transform_indices = @transform_13, window_bounds = array<i64: 256, 128>}, {pipeline_mode = #tpu.pipeline_mode<synchronous>, transform_indices = @transform_14, window_bounds = array<i64: 1, 128>}, {transform_indices = @transform_15, window_bounds = array<i64: 2, 128>}]} {
    %c0 = arith.constant 0 : index
    %c0_0 = arith.constant 0 : index
    %0 = vector.load %arg1[%c0, %c0_0] : memref<32x8xf32, #tpu.memory_space<vmem>>, vector<32x8xf32>
    %c0_1 = arith.constant 0 : index
    %c0_2 = arith.constant 0 : index
    %1 = vector.load %arg3[%c0_1, %c0_2] : memref<8x32xf32, #tpu.memory_space<vmem>>, vector<8x32xf32>
    %cst = arith.constant dense<0.000000e+00> : vector<32x32xf32>
    %2 = tpu.matmul %0, %1, %cst {dimension_numbers = #tpu.dot_dimension_numbers<[1], [0], [0], [1], [0, 0, 1, 1], [], []>} : vector<32x8xf32>, vector<8x32xf32>, vector<32x32xf32> -> vector<32x32xf32>
    %c0_3 = arith.constant 0 : index
    %c0_4 = arith.constant 0 : index
    %3 = vector.load %arg4[%c0_3, %c0_4] : memref<1x32xf32, #tpu.memory_space<vmem>>, vector<1x32xf32>
    %4 = vector.broadcast %3 : vector<1x32xf32> to vector<32x32xf32>
    %5 = arith.addf %2, %4 : vector<32x32xf32>
    %cst_5 = arith.constant 0.000000e+00 : f32
    %6 = vector.broadcast %cst_5 : f32 to vector<32x32xf32>
    %7 = arith.maximumf %5, %6 : vector<32x32xf32>
    %c0_6 = arith.constant 0 : index
    %c0_7 = arith.constant 0 : index
    %8 = vector.load %arg5[%c0_6, %c0_7] : memref<32x32xf32, #tpu.memory_space<vmem>>, vector<32x32xf32>
    %cst_8 = arith.constant dense<0.000000e+00> : vector<32x32xf32>
    %9 = tpu.matmul %7, %8, %cst_8 {dimension_numbers = #tpu.dot_dimension_numbers<[1], [0], [0], [1], [0, 0, 1, 1], [], []>} : vector<32x32xf32>, vector<32x32xf32>, vector<32x32xf32> -> vector<32x32xf32>
    %c0_9 = arith.constant 0 : index
    %c0_10 = arith.constant 0 : index
    %10 = vector.load %arg6[%c0_9, %c0_10] : memref<1x32xf32, #tpu.memory_space<vmem>>, vector<1x32xf32>
    %11 = vector.broadcast %10 : vector<1x32xf32> to vector<32x32xf32>
    %12 = arith.addf %9, %11 : vector<32x32xf32>
    %cst_11 = arith.constant 0.000000e+00 : f32
    %13 = vector.broadcast %cst_11 : f32 to vector<32x32xf32>
    %14 = arith.maximumf %12, %13 : vector<32x32xf32>
    %c0_12 = arith.constant 0 : index
    %c0_13 = arith.constant 0 : index
    %15 = vector.load %arg7[%c0_12, %c0_13] : memref<32x32xf32, #tpu.memory_space<vmem>>, vector<32x32xf32>
    %cst_14 = arith.constant dense<0.000000e+00> : vector<32x32xf32>
    %16 = tpu.matmul %14, %15, %cst_14 {dimension_numbers = #tpu.dot_dimension_numbers<[1], [0], [0], [1], [0, 0, 1, 1], [], []>} : vector<32x32xf32>, vector<32x32xf32>, vector<32x32xf32> -> vector<32x32xf32>
    %c0_15 = arith.constant 0 : index
    %c0_16 = arith.constant 0 : index
    %17 = vector.load %arg8[%c0_15, %c0_16] : memref<1x32xf32, #tpu.memory_space<vmem>>, vector<1x32xf32>
    %18 = vector.broadcast %17 : vector<1x32xf32> to vector<32x32xf32>
    %19 = arith.addf %16, %18 : vector<32x32xf32>
    %20 = vector.shape_cast %19 : vector<32x32xf32> to vector<2x16x32xf32>
    %cst_17 = arith.constant dense<0.000000e+00> : vector<2x32xf32>
    %21 = vector.multi_reduction <add>, %20, %cst_17 [1] : vector<2x16x32xf32> to vector<2x32xf32>
    %cst_18 = arith.constant 1.600000e+01 : f32
    %22 = vector.broadcast %cst_18 : f32 to vector<2x32xf32>
    %23 = arith.divf %21, %22 : vector<2x32xf32>
    %24 = arith.truncf %23 : vector<2x32xf32> to vector<2x32xbf16>
    %c0_19 = arith.constant 0 : index
    %c0_20 = arith.constant 0 : index
    %25 = vector.load %arg9[%c0_19, %c0_20] : memref<32x256xbf16, #tpu.memory_space<vmem>>, vector<32x256xbf16>
    %cst_21 = arith.constant dense<0.000000e+00> : vector<2x256xf32>
    %26 = tpu.matmul %24, %25, %cst_21 {dimension_numbers = #tpu.dot_dimension_numbers<[1], [0], [0], [1], [0, 0, 1, 1], [], []>} : vector<2x32xbf16>, vector<32x256xbf16>, vector<2x256xf32> -> vector<2x256xf32>
    %c0_22 = arith.constant 0 : index
    %c0_23 = arith.constant 0 : index
    %27 = vector.load %arg2[%c0_22, %c0_23] : memref<2x4xf32, #tpu.memory_space<vmem>>, vector<2x4xf32>
    %28 = arith.truncf %27 : vector<2x4xf32> to vector<2x4xbf16>
    %c0_24 = arith.constant 0 : index
    %c0_25 = arith.constant 0 : index
    %29 = vector.load %arg10[%c0_24, %c0_25] : memref<4x256xbf16, #tpu.memory_space<vmem>>, vector<4x256xbf16>
    %cst_26 = arith.constant dense<0.000000e+00> : vector<2x256xf32>
    %30 = tpu.matmul %28, %29, %cst_26 {dimension_numbers = #tpu.dot_dimension_numbers<[1], [0], [0], [1], [0, 0, 1, 1], [], []>} : vector<2x4xbf16>, vector<4x256xbf16>, vector<2x256xf32> -> vector<2x256xf32>
    %31 = arith.addf %26, %30 : vector<2x256xf32>
    %c0_27 = arith.constant 0 : index
    %c0_28 = arith.constant 0 : index
    %32 = vector.load %arg11[%c0_27, %c0_28] : memref<1x256xf32, #tpu.memory_space<vmem>>, vector<1x256xf32>
    %33 = vector.broadcast %32 : vector<1x256xf32> to vector<2x256xf32>
    %34 = arith.addf %31, %33 : vector<2x256xf32>
    %cst_29 = arith.constant 0.000000e+00 : f32
    %35 = vector.broadcast %cst_29 : f32 to vector<2x256xf32>
    %36 = arith.maximumf %34, %35 : vector<2x256xf32>
    %37 = arith.truncf %36 : vector<2x256xf32> to vector<2x256xbf16>
    %c0_30 = arith.constant 0 : index
    %c0_31 = arith.constant 0 : index
    %38 = vector.load %arg12[%c0_30, %c0_31] : memref<256x256xbf16, #tpu.memory_space<vmem>>, vector<256x256xbf16>
    %cst_32 = arith.constant dense<0.000000e+00> : vector<2x256xf32>
    %39 = tpu.matmul %37, %38, %cst_32 {dimension_numbers = #tpu.dot_dimension_numbers<[1], [0], [0], [1], [0, 0, 1, 1], [], []>} : vector<2x256xbf16>, vector<256x256xbf16>, vector<2x256xf32> -> vector<2x256xf32>
    %c0_33 = arith.constant 0 : index
    %c0_34 = arith.constant 0 : index
    %40 = vector.load %arg13[%c0_33, %c0_34] : memref<1x256xf32, #tpu.memory_space<vmem>>, vector<1x256xf32>
    %41 = vector.broadcast %40 : vector<1x256xf32> to vector<2x256xf32>
    %42 = arith.addf %39, %41 : vector<2x256xf32>
    %cst_35 = arith.constant 0.000000e+00 : f32
    %43 = vector.broadcast %cst_35 : f32 to vector<2x256xf32>
    %44 = arith.maximumf %42, %43 : vector<2x256xf32>
    %45 = arith.truncf %44 : vector<2x256xf32> to vector<2x256xbf16>
    %c0_36 = arith.constant 0 : index
    %c0_37 = arith.constant 0 : index
    %46 = vector.load %arg14[%c0_36, %c0_37] : memref<256x128xbf16, #tpu.memory_space<vmem>>, vector<256x128xbf16>
    %cst_38 = arith.constant dense<0.000000e+00> : vector<2x128xf32>
    %47 = tpu.matmul %45, %46, %cst_38 {dimension_numbers = #tpu.dot_dimension_numbers<[1], [0], [0], [1], [0, 0, 1, 1], [], []>} : vector<2x256xbf16>, vector<256x128xbf16>, vector<2x128xf32> -> vector<2x128xf32>
    %c0_39 = arith.constant 0 : index
    %c0_40 = arith.constant 0 : index
    %48 = vector.load %arg15[%c0_39, %c0_40] : memref<1x128xf32, #tpu.memory_space<vmem>>, vector<1x128xf32>
    %49 = vector.broadcast %48 : vector<1x128xf32> to vector<2x128xf32>
    %50 = arith.addf %47, %49 : vector<2x128xf32>
    %c0_41 = arith.constant 0 : index
    %c0_42 = arith.constant 0 : index
    %51 = vector.load %arg16[%c0_41, %c0_42] : memref<2x128xf32, #tpu.memory_space<vmem>>, vector<2x128xf32>
    tpu.vector_store %arg16[%c0_41, %c0_42], %50 {strides = array<i32>} : memref<2x128xf32, #tpu.memory_space<vmem>>, vector<2x128xf32>,
    return
  }
  func.func @transform_0(%arg0: i32) -> (i32, i32) {
    %c0_i32 = arith.constant 0 : i32
    %c0_i32_0 = arith.constant 0 : i32
    return %arg0, %c0_i32 : i32, i32
  }
  func.func @transform_1(%arg0: i32) -> (i32, i32) {
    %c0_i32 = arith.constant 0 : i32
    %c0_i32_0 = arith.constant 0 : i32
    return %arg0, %c0_i32 : i32, i32
  }
  func.func @transform_2(%arg0: i32) -> (i32, i32) {
    %c0_i32 = arith.constant 0 : i32
    %c0_i32_0 = arith.constant 0 : i32
    %c0_i32_1 = arith.constant 0 : i32
    return %c0_i32, %c0_i32_0 : i32, i32
  }
  func.func @transform_3(%arg0: i32) -> (i32, i32) {
    %c0_i32 = arith.constant 0 : i32
    %c0_i32_0 = arith.constant 0 : i32
    %c0_i32_1 = arith.constant 0 : i32
    return %c0_i32, %c0_i32_0 : i32, i32
  }
  func.func @transform_4(%arg0: i32) -> (i32, i32) {
    %c0_i32 = arith.constant 0 : i32
    %c0_i32_0 = arith.constant 0 : i32
    %c0_i32_1 = arith.constant 0 : i32
    return %c0_i32, %c0_i32_0 : i32, i32
  }
  func.func @transform_5(%arg0: i32) -> (i32, i32) {
    %c0_i32 = arith.constant 0 : i32
    %c0_i32_0 = arith.constant 0 : i32
    %c0_i32_1 = arith.constant 0 : i32
    return %c0_i32, %c0_i32_0 : i32, i32
  }
  func.func @transform_6(%arg0: i32) -> (i32, i32) {
    %c0_i32 = arith.constant 0 : i32
    %c0_i32_0 = arith.constant 0 : i32
    %c0_i32_1 = arith.constant 0 : i32
    return %c0_i32, %c0_i32_0 : i32, i32
  }
  func.func @transform_7(%arg0: i32) -> (i32, i32) {
    %c0_i32 = arith.constant 0 : i32
    %c0_i32_0 = arith.constant 0 : i32
    %c0_i32_1 = arith.constant 0 : i32
    return %c0_i32, %c0_i32_0 : i32, i32
  }
  func.func @transform_8(%arg0: i32) -> (i32, i32) {
    %c0_i32 = arith.constant 0 : i32
    %c0_i32_0 = arith.constant 0 : i32
    %c0_i32_1 = arith.constant 0 : i32
    return %c0_i32, %c0_i32_0 : i32, i32
  }
  func.func @transform_9(%arg0: i32) -> (i32, i32) {
    %c0_i32 = arith.constant 0 : i32
    %c0_i32_0 = arith.constant 0 : i32
    %c0_i32_1 = arith.constant 0 : i32
    return %c0_i32, %c0_i32_0 : i32, i32
  }
  func.func @transform_10(%arg0: i32) -> (i32, i32) {
    %c0_i32 = arith.constant 0 : i32
    %c0_i32_0 = arith.constant 0 : i32
    %c0_i32_1 = arith.constant 0 : i32
    return %c0_i32, %c0_i32_0 : i32, i32
  }
  func.func @transform_11(%arg0: i32) -> (i32, i32) {
    %c0_i32 = arith.constant 0 : i32
    %c0_i32_0 = arith.constant 0 : i32
    %c0_i32_1 = arith.constant 0 : i32
    return %c0_i32, %c0_i32_0 : i32, i32
  }
  func.func @transform_12(%arg0: i32) -> (i32, i32) {
    %c0_i32 = arith.constant 0 : i32
    %c0_i32_0 = arith.constant 0 : i32
    %c0_i32_1 = arith.constant 0 : i32
    return %c0_i32, %c0_i32_0 : i32, i32
  }
  func.func @transform_13(%arg0: i32) -> (i32, i32) {
    %c0_i32 = arith.constant 0 : i32
    %c0_i32_0 = arith.constant 0 : i32
    %c0_i32_1 = arith.constant 0 : i32
    return %c0_i32, %c0_i32_0 : i32, i32
  }
  func.func @transform_14(%arg0: i32) -> (i32, i32) {
    %c0_i32 = arith.constant 0 : i32
    %c0_i32_0 = arith.constant 0 : i32
    %c0_i32_1 = arith.constant 0 : i32
    return %c0_i32, %c0_i32_0 : i32, i32
  }
  func.func @transform_15(%arg0: i32) -> (i32, i32) {
    %c0_i32 = arith.constant 0 : i32
    %c0_i32_0 = arith.constant 0 : i32
    return %arg0, %c0_i32 : i32, i32
  }
}

</mosaic_0001>

<llo_original>
// kernel: mosoftq_forward.1
$region0: #{mosoftq_forward.1}
  #allocation0 [shape = 'u32[]', space=smem, size = 0x4, offset = 0x4, fixed_abs, tag = 'smem constant byte address 0x4 - core index']
  #allocation1 [shape = 'u32[72,128]{1,0:T(1,128)}', space=vmem, size = 0x9000, scoped, tag = 'internal scratch']
  %s0 = inlined_call_operand.vmem [shape: f32[32,8], index: 0, kind: input, shape index: {}]
  %s1 = inlined_call_operand.vmem [shape: f32[2,4], index: 1, kind: input, shape index: {}]
  %s2 = inlined_call_operand.vmem [shape: f32[8,32], index: 2, kind: input, shape index: {}]
  %s3 = inlined_call_operand.vmem [shape: f32[1,32], index: 3, kind: input, shape index: {}]
  %s4 = inlined_call_operand.vmem [shape: f32[32,32], index: 4, kind: input, shape index: {}]
  %s5 = inlined_call_operand.vmem [shape: f32[1,32], index: 5, kind: input, shape index: {}]
  %s6 = inlined_call_operand.vmem [shape: f32[32,32], index: 6, kind: input, shape index: {}]
  %s7 = inlined_call_operand.vmem [shape: f32[1,32], index: 7, kind: input, shape index: {}]
  %s8 = inlined_call_operand.vmem [shape: bf16[32,256], index: 8, kind: input, shape index: {}]
  %s9 = inlined_call_operand.vmem [shape: bf16[4,256], index: 9, kind: input, shape index: {}]
  %s10 = inlined_call_operand.vmem [shape: f32[1,256], index: 10, kind: input, shape index: {}]
  %s11 = inlined_call_operand.vmem [shape: bf16[256,256], index: 11, kind: input, shape index: {}]
  %s12 = inlined_call_operand.vmem [shape: f32[1,256], index: 12, kind: input, shape index: {}]
  %s13 = inlined_call_operand.vmem [shape: bf16[256,128], index: 13, kind: input, shape index: {}]
  %s14 = inlined_call_operand.vmem [shape: f32[1,128], index: 14, kind: input, shape index: {}]
  %s15 = inlined_call_operand.hbm [shape: f32[2,128], index: 15, kind: output, shape index: {}]
  %s16 = sld [smem:[#allocation0]]
  $region70: #{mosoftq_forward.1} parent=0
    _
  %s18 = ssub.s32 1, %s16
  %s19 = scalar_select 0, %s18, %s16
  $region1: #{mosoftq_forward.1} parent=0
    #allocation2 [shape = 'u8[1024]{0}', space=vmem, size = 0x400, scoped, tag = 'output window, operand 0, single buffered']
    #allocation3 [shape = 's32[1]{0}', space=sflag, size = 0x4, scoped, tag = 'scoped memory for mosoftq_forward.1']
    %20 = vsyncpa [#allocation3], 0
    // Predicated region
    $region2: #{mosoftq_forward.1} parent=1 // pred_check
      _
    $region3: #{mosoftq_forward.1} parent=1 // pred_check_branch
      %22 = sbr.rel (0) target = $region5
    $region4: #{mosoftq_forward.1} parent=1 // pred_region
      _
    $region5: #{mosoftq_forward.1} parent=1 // pred_fallthru
      _
    // Predicated region
    $region6: #{mosoftq_forward.1} parent=1 // pred_check
      _
    $region7: #{mosoftq_forward.1} parent=1 // pred_check_branch
      %24 = sbr.rel (0) target = $region9
    $region8: #{mosoftq_forward.1} parent=1 // pred_region
      _
    $region9: #{mosoftq_forward.1} parent=1 // pred_fallthru
      _
    // Predicated region
    $region10: #{mosoftq_forward.1} parent=1 // pred_check
      _
    $region11: #{mosoftq_forward.1} parent=1 // pred_check_branch
      %26 = sbr.rel (0) target = $region13
    $region12: #{mosoftq_forward.1} parent=1 // pred_region
      _
    $region13: #{mosoftq_forward.1} parent=1 // pred_fallthru
      _
    // Predicated region
    $region14: #{mosoftq_forward.1} parent=1 // pred_check
      _
    $region15: #{mosoftq_forward.1} parent=1 // pred_check_branch
      %28 = sbr.rel (0) target = $region17
    $region16: #{mosoftq_forward.1} parent=1 // pred_region
      _
    $region17: #{mosoftq_forward.1} parent=1 // pred_fallthru
      _
    // Predicated region
    $region18: #{mosoftq_forward.1} parent=1 // pred_check
      _
    $region19: #{mosoftq_forward.1} parent=1 // pred_check_branch
      %30 = sbr.rel (0) target = $region21
    $region20: #{mosoftq_forward.1} parent=1 // pred_region
      _
    $region21: #{mosoftq_forward.1} parent=1 // pred_fallthru
      _
    // Predicated region
    $region22: #{mosoftq_forward.1} parent=1 // pred_check
      _
    $region23: #{mosoftq_forward.1} parent=1 // pred_check_branch
      %32 = sbr.rel (0) target = $region25
    $region24: #{mosoftq_forward.1} parent=1 // pred_region
      _
    $region25: #{mosoftq_forward.1} parent=1 // pred_fallthru
      _
    // Predicated region
    $region26: #{mosoftq_forward.1} parent=1 // pred_check
      _
    $region27: #{mosoftq_forward.1} parent=1 // pred_check_branch
      %34 = sbr.rel (0) target = $region29
    $region28: #{mosoftq_forward.1} parent=1 // pred_region
      _
    $region29: #{mosoftq_forward.1} parent=1 // pred_fallthru
      _
    // Predicated region
    $region30: #{mosoftq_forward.1} parent=1 // pred_check
      _
    $region31: #{mosoftq_forward.1} parent=1 // pred_check_branch
      %36 = sbr.rel (0) target = $region33
    $region32: #{mosoftq_forward.1} parent=1 // pred_region
      _
    $region33: #{mosoftq_forward.1} parent=1 // pred_fallthru
      _
    // Predicated region
    $region34: #{mosoftq_forward.1} parent=1 // pred_check
      _
    $region35: #{mosoftq_forward.1} parent=1 // pred_check_branch
      %38 = sbr.rel (0) target = $region37
    $region36: #{mosoftq_forward.1} parent=1 // pred_region
      _
    $region37: #{mosoftq_forward.1} parent=1 // pred_fallthru
      _
    // Predicated region
    $region38: #{mosoftq_forward.1} parent=1 // pred_check
      _
    $region39: #{mosoftq_forward.1} parent=1 // pred_check_branch
      %40 = sbr.rel (0) target = $region41
    $region40: #{mosoftq_forward.1} parent=1 // pred_region
      _
    $region41: #{mosoftq_forward.1} parent=1 // pred_fallthru
      _
    // Predicated region
    $region42: #{mosoftq_forward.1} parent=1 // pred_check
      _
    $region43: #{mosoftq_forward.1} parent=1 // pred_check_branch
      %42 = sbr.rel (0) target = $region45
    $region44: #{mosoftq_forward.1} parent=1 // pred_region
      _
    $region45: #{mosoftq_forward.1} parent=1 // pred_fallthru
      _
    // Predicated region
    $region46: #{mosoftq_forward.1} parent=1 // pred_check
      _
    $region47: #{mosoftq_forward.1} parent=1 // pred_check_branch
      %44 = sbr.rel (0) target = $region49
    $region48: #{mosoftq_forward.1} parent=1 // pred_region
      _
    $region49: #{mosoftq_forward.1} parent=1 // pred_fallthru
      _
    // Predicated region
    $region50: #{mosoftq_forward.1} parent=1 // pred_check
      _
    $region51: #{mosoftq_forward.1} parent=1 // pred_check_branch
      %46 = sbr.rel (0) target = $region53
    $region52: #{mosoftq_forward.1} parent=1 // pred_region
      _
    $region53: #{mosoftq_forward.1} parent=1 // pred_fallthru
      _
    // Predicated region
    $region54: #{mosoftq_forward.1} parent=1 // pred_check
      _
    $region55: #{mosoftq_forward.1} parent=1 // pred_check_branch
      %48 = sbr.rel (0) target = $region57
    $region56: #{mosoftq_forward.1} parent=1 // pred_region
      _
    $region57: #{mosoftq_forward.1} parent=1 // pred_fallthru
      _
    // Predicated region
    $region58: #{mosoftq_forward.1} parent=1 // pred_check
      _
    $region59: #{mosoftq_forward.1} parent=1 // pred_check_branch
      %50 = sbr.rel (0) target = $region61
    $region60: #{mosoftq_forward.1} parent=1 // pred_region
      _
    $region61: #{mosoftq_forward.1} parent=1 // pred_fallthru
      _
    %v52 = vld [vmem:[%s0] sm:$0xff]
    %v53 = vld [vmem:[%s0 + $0x8] sm:$0xff]
    %v54 = vld [vmem:[%s0 + $0x10] sm:$0xff]
    %v55 = vld [vmem:[%s0 + $0x18] sm:$0xff]
    %v56 = vld [vmem:[%s2] sm:$0xff]
    %v57 = vld [vmem:[%s3] sm:$0x1]
    %v59 = vperm.slane %v57, 0
    %vm61 = vcmask 64512
    %v63 = vsel %vm61, %v52, 0
    %v66 = vsel %vm61, %v53, 0
    %v69 = vsel %vm61, %v54, 0
    %v72 = vsel %vm61, %v55, 0
    %74 = vmatpush.msra.mxu0 0.0
    %75 = vmatpush.msra.mxu0 0.0
    %76 = vmatpush.msra.mxu0 0.0
    %77 = vmatpush.msra.mxu0 0.0
    %78 = vmatpush.msra.mxu0 0.0
    %79 = vmatpush.msra.mxu0 0.0
    %80 = vmatpush.msra.mxu0 0.0
    %81 = vmatpush.msra.mxu0 0.0
    %82 = vmatpush.msra.mxu0 0.0
    %83 = vmatpush.msra.mxu0 0.0
    %84 = vmatpush.msra.mxu0 0.0
    %85 = vmatpush.msra.mxu0 0.0
    %86 = vmatpush.msra.mxu0 0.0
    %87 = vmatpush.msra.mxu0 0.0
    %88 = vmatpush.msra.mxu0 0.0
    %89 = vmatpush.msra.mxu0 %v56
    %90 = vmatmul.f32.gmra.mxu0 %v63
    %v91 = vpop.f32.mrf.mxu0
    %v92 = vadd.f32 %v59, %v91
    %93 = vmatmul.f32.gmra.mxu0 %v66
    %v94 = vpop.f32.mrf.mxu0
    %v95 = vadd.f32 %v59, %v94
    %96 = vmatmul.f32.gmra.mxu0 %v69
    %v97 = vpop.f32.mrf.mxu0
    %v98 = vadd.f32 %v59, %v97
    %99 = vmatmul.f32.gmra.mxu0 %v72
    %v100 = vpop.f32.mrf.mxu0
    %v101 = vadd.f32 %v59, %v100
    %102 = vdwg.mxu0
    %v103 = vmax.f32 %v92, 0.0
    %v104 = vmax.f32 %v95, 0.0
    %v105 = vmax.f32 %v98, 0.0
    %v106 = vmax.f32 %v101, 0.0
    %v107 = vld [vmem:[%s4] sm:$0xff]
    %v108 = vld [vmem:[%s4 + $0x8] sm:$0xff]
    %v109 = vld [vmem:[%s4 + $0x10] sm:$0xff]
    %v110 = vld [vmem:[%s4 + $0x18] sm:$0xff]
    %v111 = vld [vmem:[%s5] sm:$0x1]
    %v113 = vperm.slane %v111, 0
    %vm115 = vcmask 261120
    %v117 = vsel %vm115, %v103, 0
    %v120 = vsel %vm115, %v104, 0
    %v123 = vsel %vm115, %v105, 0
    %v126 = vsel %vm115, %v106, 0
    %128 = vmatpush.msra.mxu0 0.0
    %129 = vmatpush.msra.mxu0 0.0
    %130 = vmatpush.msra.mxu0 0.0
    %131 = vmatpush.msra.mxu0 0.0
    %132 = vmatpush.msra.mxu0 0.0
    %133 = vmatpush.msra.mxu0 0.0
    %134 = vmatpush.msra.mxu0 0.0
    %135 = vmatpush.msra.mxu0 0.0
    %136 = vmatpush.msra.mxu0 0.0
    %137 = vmatpush.msra.mxu0 0.0
    %138 = vmatpush.msra.mxu0 0.0
    %139 = vmatpush.msra.mxu0 0.0
    %140 = vmatpush.msra.mxu0 %v110
    %141 = vmatpush.msra.mxu0 %v109
    %142 = vmatpush.msra.mxu0 %v108
    %143 = vmatpush.msra.mxu0 %v107
    %144 = vmatmul.f32.gmra.mxu0 %v117
    %v145 = vpop.f32.mrf.mxu0
    %v146 = vadd.f32 %v113, %v145
    %147 = vmatmul.f32.gmra.mxu0 %v120
    %v148 = vpop.f32.mrf.mxu0
    %v149 = vadd.f32 %v113, %v148
    %150 = vmatmul.f32.gmra.mxu0 %v123
    %v151 = vpop.f32.mrf.mxu0
    %v152 = vadd.f32 %v113, %v151
    %153 = vmatmul.f32.gmra.mxu0 %v126
    %v154 = vpop.f32.mrf.mxu0
    %v155 = vadd.f32 %v113, %v154
    %156 = vdwg.mxu0
    %v157 = vmax.f32 %v146, 0.0
    %v158 = vmax.f32 %v149, 0.0
    %v159 = vmax.f32 %v152, 0.0
    %v160 = vmax.f32 %v155, 0.0
    %v161 = vld [vmem:[%s6] sm:$0xff]
    %v162 = vld [vmem:[%s6 + $0x8] sm:$0xff]
    %v163 = vld [vmem:[%s6 + $0x10] sm:$0xff]
    %v164 = vld [vmem:[%s6 + $0x18] sm:$0xff]
    %v165 = vld [vmem:[%s7] sm:$0x1]
    %v167 = vperm.slane %v165, 0
    %v170 = vsel %vm115, %v157, 0
    %v173 = vsel %vm115, %v158, 0
    %v176 = vsel %vm115, %v159, 0
    %v179 = vsel %vm115, %v160, 0
    %181 = vmatpush.msra.mxu0 0.0
    %182 = vmatpush.msra.mxu0 0.0
    %183 = vmatpush.msra.mxu0 0.0
    %184 = vmatpush.msra.mxu0 0.0
    %185 = vmatpush.msra.mxu0 0.0
    %186 = vmatpush.msra.mxu0 0.0
    %187 = vmatpush.msra.mxu0 0.0
    %188 = vmatpush.msra.mxu0 0.0
    %189 = vmatpush.msra.mxu0 0.0
    %190 = vmatpush.msra.mxu0 0.0
    %191 = vmatpush.msra.mxu0 0.0
    %192 = vmatpush.msra.mxu0 0.0
    %193 = vmatpush.msra.mxu0 %v164
    %194 = vmatpush.msra.mxu0 %v163
    %195 = vmatpush.msra.mxu0 %v162
    %196 = vmatpush.msra.mxu0 %v161
    %197 = vmatmul.f32.gmra.mxu0 %v170
    %v198 = vpop.f32.mrf.mxu0
    %v199 = vadd.f32 %v167, %v198
    %200 = vmatmul.f32.gmra.mxu0 %v173
    %v201 = vpop.f32.mrf.mxu0
    %v202 = vadd.f32 %v167, %v201
    %203 = vmatmul.f32.gmra.mxu0 %v176
    %v204 = vpop.f32.mrf.mxu0
    %v205 = vadd.f32 %v167, %v204
    %206 = vmatmul.f32.gmra.mxu0 %v179
    %v207 = vpop.f32.mrf.mxu0
    %v208 = vadd.f32 %v167, %v207
    %209 = vdwg.mxu0
    %v210 = vsel %vm115, %v199, 0.0
    %v211 = vsel %vm115, %v202, 0.0
    %v212 = vadd.f32 %v210, %v211
    %v213 = vrot.slane %v212, 4
    %v214 = vadd.f32 %v212, %v213
    %v215 = vrot.slane %v214, 2
    %v216 = vadd.f32 %v214, %v215
    %v217 = vrot.slane %v216, 1
    %v218 = vadd.f32 %v216, %v217
    %v219 = vsel %vm115, %v205, 0.0
    %v220 = vsel %vm115, %v208, 0.0
    %v221 = vadd.f32 %v219, %v220
    %v222 = vrot.slane %v221, 4
    %v223 = vadd.f32 %v221, %v222
    %v224 = vrot.slane %v223, 2
    %v225 = vadd.f32 %v223, %v224
    %v226 = vrot.slane %v225, 1
    %v227 = vadd.f32 %v225, %v226
    %v228 = vrcp.pop 16.0
    %v229 = vmul.f32 16.0, %v228
    %v230 = vsub.f32 1.0, %v229
    %v231 = vmul.f32 %v228, %v230
    %v232 = vadd.f32 %v228, %v231
    %vm233 = vweird.f32 %v228
    %v234 = vsel %vm233, %v228, %v232
    %v235 = vmul.f32 %v218, %v234
    %v236 = vmul.f32 %v227, %v234
    %v237 = vpack.c.bf16 %v235, %v235
    %v238 = vpack.c.bf16 %v236, %v236
    %v239 = vld [vmem:[%s8] sm:$0xff]
    %v240 = vld [vmem:[%s8 + $0x8] sm:$0xff]
    %v241 = vld [vmem:[%s8 + $0x10] sm:$0xff]
    %v242 = vld [vmem:[%s8 + $0x18] sm:$0xff]
    %v243 = vld [vmem:[%s1] sm:$0x3]
    %v244 = vpack.c.bf16 %v243, %v243
    %v245 = vld [vmem:[%s9] sm:$0xf]
    %247 = vst [vmem:[#allocation1] ss:$4 sm:$0xff] %v245
    %v248 = vld.sshfl [vmem:[#allocation1] sm:$0xff pattern:$0x73625140]
    %v249 = vld.sshfl [vmem:[#allocation1 + $0x8] sm:$0xff pattern:$0x73625140]
    %vm250 = vcmask 31744
    %v252 = vsel %vm250, %v244, 0
    %vm254 = vcmask 1041408
    %v255 = vsel %vm254, %v248, 0
    %v257 = vsel %vm254, %v249, 0
    %259 = vmatpush.bf16.msra.mxu0 0
    %260 = vmatpush.bf16.msra.mxu0 0
    %261 = vmatpush.bf16.msra.mxu0 0
    %262 = vmatpush.bf16.msra.mxu0 0
    %263 = vmatpush.bf16.msra.mxu0 0
    %264 = vmatpush.bf16.msra.mxu0 0
    %265 = vmatpush.bf16.msra.mxu0 0
    %266 = vmatpush.bf16.msra.mxu0 %v255
    %267 = vmatmul.bf16.gmra.mxu0 %v252
    %v268 = vpop.f32.mrf.mxu0
    %v269 = vadd.f32 0.0, %v268
    %v270 = vpop.f32.mrf.mxu0
    %271 = vdwg.mxu0
    %272 = vmatpush.bf16.msra.mxu0 0
    %273 = vmatpush.bf16.msra.mxu0 0
    %274 = vmatpush.bf16.msra.mxu0 0
    %275 = vmatpush.bf16.msra.mxu0 0
    %276 = vmatpush.bf16.msra.mxu0 0
    %277 = vmatpush.bf16.msra.mxu0 0
    %278 = vmatpush.bf16.msra.mxu0 0
    %279 = vmatpush.bf16.msra.mxu0 %v257
    %280 = vmatmul.bf16.gmra.mxu0 %v252
    %v281 = vpop.f32.mrf.mxu0
    %v282 = vadd.f32 0.0, %v281
    %v283 = vpop.f32.mrf.mxu0
    %284 = vdwg.mxu0
    %v287 = vunpack.c.l.b16 %v237
    %v288 = vunpack.c.l.b16 %v238
    %vm289 = vcmask 1041409
    %v290 = vsel %vm289, %v288, %v287
    %v291 = vpack.c.b16 %v290, %v290
    %v296 = vunpack.c.l.b16 %v239
    %v297 = vunpack.c.h.b16 %v239
    %v298 = vunpack.c.l.b16 %v240
    %v299 = vunpack.c.h.b16 %v240
    %v300 = vunpack.c.l.b16 %v241
    %v301 = vunpack.c.h.b16 %v241
    %v302 = vunpack.c.l.b16 %v242
    %v303 = vunpack.c.h.b16 %v242
    %v304 = vpack.c.b16 %v298, %v296
    %v305 = vpack.c.b16 %v299, %v297
    %v306 = vpack.c.b16 %v302, %v300
    %v307 = vpack.c.b16 %v303, %v301
    %v313 = vsel %vm115, %v291, 0
    %315 = vmatpush.bf16.msra.mxu0 0
    %316 = vmatpush.bf16.msra.mxu0 0
    %317 = vmatpush.bf16.msra.mxu0 0
    %318 = vmatpush.bf16.msra.mxu0 0
    %319 = vmatpush.bf16.msra.mxu0 0
    %320 = vmatpush.bf16.msra.mxu0 0
    %321 = vmatpush.bf16.msra.mxu0 %v306
    %322 = vmatpush.bf16.msra.mxu0 %v304
    %323 = vmatmul.bf16.gmra.mxu0 %v313
    %v324 = vpop.f32.mrf.mxu0
    %v325 = vadd.f32 %v269, %v324
    %v326 = vpop.f32.mrf.mxu0
    %327 = vdwg.mxu0
    %328 = vmatpush.bf16.msra.mxu0 0
    %329 = vmatpush.bf16.msra.mxu0 0
    %330 = vmatpush.bf16.msra.mxu0 0
    %331 = vmatpush.bf16.msra.mxu0 0
    %332 = vmatpush.bf16.msra.mxu0 0
    %333 = vmatpush.bf16.msra.mxu0 0
    %334 = vmatpush.bf16.msra.mxu0 %v307
    %335 = vmatpush.bf16.msra.mxu0 %v305
    %336 = vmatmul.bf16.gmra.mxu0 %v313
    %v337 = vpop.f32.mrf.mxu0
    %v338 = vadd.f32 %v282, %v337
    %v339 = vpop.f32.mrf.mxu0
    %340 = vdwg.mxu0
    %v341 = vld [vmem:[%s10] sm:$0x3]
    %v343 = vperm.slane %v341, 0
    %v344 = vperm.slane %v341, 1
    %v347 = vadd.f32 %v325, %v343
    %v348 = vadd.f32 %v338, %v344
    %v349 = vmax.f32 %v347, 0.0
    %v350 = vmax.f32 %v348, 0.0
    %v351 = vpack.c.bf16 %v349, %v349
    %v352 = vpack.c.bf16 %v350, %v350
    %v353 = vld [vmem:[%s11] sm:$0xff]
    %v354 = vld [vmem:[%s11 + $0x8] sm:$0xff]
    %v355 = vld [vmem:[%s11 + $0x10] sm:$0xff]
    %v356 = vld [vmem:[%s11 + $0x18] sm:$0xff]
    %v357 = vld [vmem:[%s11 + $0x20] sm:$0xff]
    %v358 = vld [vmem:[%s11 + $0x28] sm:$0xff]
    %v359 = vld [vmem:[%s11 + $0x30] sm:$0xff]
    %v360 = vld [vmem:[%s11 + $0x38] sm:$0xff]
    %v361 = vld [vmem:[%s11 + $0x40] sm:$0xff]
    %v362 = vld [vmem:[%s11 + $0x48] sm:$0xff]
    %v363 = vld [vmem:[%s11 + $0x50] sm:$0xff]
    %v364 = vld [vmem:[%s11 + $0x58] sm:$0xff]
    %v365 = vld [vmem:[%s11 + $0x60] sm:$0xff]
    %v366 = vld [vmem:[%s11 + $0x68] sm:$0xff]
    %v367 = vld [vmem:[%s11 + $0x70] sm:$0xff]
    %v368 = vld [vmem:[%s11 + $0x78] sm:$0xff]
    %v369 = vld [vmem:[%s11 + $0x80] sm:$0xff]
    %v370 = vld [vmem:[%s11 + $0x88] sm:$0xff]
    %v371 = vld [vmem:[%s11 + $0x90] sm:$0xff]
    %v372 = vld [vmem:[%s11 + $0x98] sm:$0xff]
    %v373 = vld [vmem:[%s11 + $0xa0] sm:$0xff]
    %v374 = vld [vmem:[%s11 + $0xa8] sm:$0xff]
    %v375 = vld [vmem:[%s11 + $0xb0] sm:$0xff]
    %v376 = vld [vmem:[%s11 + $0xb8] sm:$0xff]
    %v377 = vld [vmem:[%s11 + $0xc0] sm:$0xff]
    %v378 = vld [vmem:[%s11 + $0xc8] sm:$0xff]
    %v379 = vld [vmem:[%s11 + $0xd0] sm:$0xff]
    %v380 = vld [vmem:[%s11 + $0xd8] sm:$0xff]
    %v381 = vld [vmem:[%s11 + $0xe0] sm:$0xff]
    %v382 = vld [vmem:[%s11 + $0xe8] sm:$0xff]
    %v383 = vld [vmem:[%s11 + $0xf0] sm:$0xff]
    %v384 = vld [vmem:[%s11 + $0xf8] sm:$0xff]
    %v385 = vld [vmem:[%s12] sm:$0x3]
    %v387 = vperm.slane %v385, 0
    %v388 = vperm.slane %v385, 1
    %v423 = vunpack.c.l.b16 %v353
    %v424 = vunpack.c.h.b16 %v353
    %v425 = vunpack.c.l.b16 %v354
    %v426 = vunpack.c.h.b16 %v354
    %v427 = vunpack.c.l.b16 %v355
    %v428 = vunpack.c.h.b16 %v355
    %v429 = vunpack.c.l.b16 %v356
    %v430 = vunpack.c.h.b16 %v356
    %v431 = vunpack.c.l.b16 %v357
    %v432 = vunpack.c.h.b16 %v357
    %v433 = vunpack.c.l.b16 %v358
    %v434 = vunpack.c.h.b16 %v358
    %v435 = vunpack.c.l.b16 %v359
    %v436 = vunpack.c.h.b16 %v359
    %v437 = vunpack.c.l.b16 %v360
    %v438 = vunpack.c.h.b16 %v360
    %v439 = vunpack.c.l.b16 %v361
    %v440 = vunpack.c.h.b16 %v361
    %v441 = vunpack.c.l.b16 %v362
    %v442 = vunpack.c.h.b16 %v362
    %v443 = vunpack.c.l.b16 %v363
    %v444 = vunpack.c.h.b16 %v363
    %v445 = vunpack.c.l.b16 %v364
    %v446 = vunpack.c.h.b16 %v364
    %v447 = vunpack.c.l.b16 %v365
    %v448 = vunpack.c.h.b16 %v365
    %v449 = vunpack.c.l.b16 %v366
    %v450 = vunpack.c.h.b16 %v366
    %v451 = vunpack.c.l.b16 %v367
    %v452 = vunpack.c.h.b16 %v367
    %v453 = vunpack.c.l.b16 %v368
    %v454 = vunpack.c.h.b16 %v368
    %v455 = vunpack.c.l.b16 %v369
    %v456 = vunpack.c.h.b16 %v369
    %v457 = vunpack.c.l.b16 %v370
    %v458 = vunpack.c.h.b16 %v370
    %v459 = vunpack.c.l.b16 %v371
    %v460 = vunpack.c.h.b16 %v371
    %v461 = vunpack.c.l.b16 %v372
    %v462 = vunpack.c.h.b16 %v372
    %v463 = vunpack.c.l.b16 %v373
    %v464 = vunpack.c.h.b16 %v373
    %v465 = vunpack.c.l.b16 %v374
    %v466 = vunpack.c.h.b16 %v374
    %v467 = vunpack.c.l.b16 %v375
    %v468 = vunpack.c.h.b16 %v375
    %v469 = vunpack.c.l.b16 %v376
    %v470 = vunpack.c.h.b16 %v376
    %v471 = vunpack.c.l.b16 %v377
    %v472 = vunpack.c.h.b16 %v377
    %v473 = vunpack.c.l.b16 %v378
    %v474 = vunpack.c.h.b16 %v378
    %v475 = vunpack.c.l.b16 %v379
    %v476 = vunpack.c.h.b16 %v379
    %v477 = vunpack.c.l.b16 %v380
    %v478 = vunpack.c.h.b16 %v380
    %v479 = vunpack.c.l.b16 %v381
    %v480 = vunpack.c.h.b16 %v381
    %v481 = vunpack.c.l.b16 %v382
    %v482 = vunpack.c.h.b16 %v382
    %v483 = vunpack.c.l.b16 %v383
    %v484 = vunpack.c.h.b16 %v383
    %v485 = vunpack.c.l.b16 %v384
    %v486 = vunpack.c.h.b16 %v384
    %v487 = vpack.c.b16 %v425, %v423
    %v488 = vpack.c.b16 %v426, %v424
    %v489 = vpack.c.b16 %v429, %v427
    %v490 = vpack.c.b16 %v430, %v428
    %v491 = vpack.c.b16 %v433, %v431
    %v492 = vpack.c.b16 %v434, %v432
    %v493 = vpack.c.b16 %v437, %v435
    %v494 = vpack.c.b16 %v438, %v436
    %v495 = vpack.c.b16 %v441, %v439
    %v496 = vpack.c.b16 %v442, %v440
    %v497 = vpack.c.b16 %v445, %v443
    %v498 = vpack.c.b16 %v446, %v444
    %v499 = vpack.c.b16 %v449, %v447
    %v500 = vpack.c.b16 %v450, %v448
    %v501 = vpack.c.b16 %v453, %v451
    %v502 = vpack.c.b16 %v454, %v452
    %v503 = vpack.c.b16 %v457, %v455
    %v504 = vpack.c.b16 %v458, %v456
    %v505 = vpack.c.b16 %v461, %v459
    %v506 = vpack.c.b16 %v462, %v460
    %v507 = vpack.c.b16 %v465, %v463
    %v508 = vpack.c.b16 %v466, %v464
    %v509 = vpack.c.b16 %v469, %v467
    %v510 = vpack.c.b16 %v470, %v468
    %v511 = vpack.c.b16 %v473, %v471
    %v512 = vpack.c.b16 %v474, %v472
    %v513 = vpack.c.b16 %v477, %v475
    %v514 = vpack.c.b16 %v478, %v476
    %v515 = vpack.c.b16 %v481, %v479
    %v516 = vpack.c.b16 %v482, %v480
    %v517 = vpack.c.b16 %v485, %v483
    %v518 = vpack.c.b16 %v486, %v484
    %551 = vmatpush.bf16.msra.mxu0 %v501
    %552 = vmatpush.bf16.msra.mxu0 %v499
    %553 = vmatpush.bf16.msra.mxu0 %v497
    %554 = vmatpush.bf16.msra.mxu0 %v495
    %555 = vmatpush.bf16.msra.mxu0 %v493
    %556 = vmatpush.bf16.msra.mxu0 %v491
    %557 = vmatpush.bf16.msra.mxu0 %v489
    %558 = vmatpush.bf16.msra.mxu0 %v487
    %559 = vmatmul.bf16.gmra.mxu0 %v351
    %v560 = vpop.f32.mrf.mxu0
    %v561 = vadd.f32 %v387, %v560
    %v562 = vpop.f32.mrf.mxu0
    %563 = vdwg.mxu0
    %564 = vmatpush.bf16.msra.mxu0 %v517
    %565 = vmatpush.bf16.msra.mxu0 %v515
    %566 = vmatpush.bf16.msra.mxu0 %v513
    %567 = vmatpush.bf16.msra.mxu0 %v511
    %568 = vmatpush.bf16.msra.mxu0 %v509
    %569 = vmatpush.bf16.msra.mxu0 %v507
    %570 = vmatpush.bf16.msra.mxu0 %v505
    %571 = vmatpush.bf16.msra.mxu0 %v503
    %572 = vmatmul.bf16.gmra.mxu0 %v352
    %v573 = vpop.f32.mrf.mxu0
    %v574 = vadd.f32 %v561, %v573
    %v575 = vpop.f32.mrf.mxu0
    %576 = vdwg.mxu0
    %577 = vmatpush.bf16.msra.mxu0 %v502
    %578 = vmatpush.bf16.msra.mxu0 %v500
    %579 = vmatpush.bf16.msra.mxu0 %v498
    %580 = vmatpush.bf16.msra.mxu0 %v496
    %581 = vmatpush.bf16.msra.mxu0 %v494
    %582 = vmatpush.bf16.msra.mxu0 %v492
    %583 = vmatpush.bf16.msra.mxu0 %v490
    %584 = vmatpush.bf16.msra.mxu0 %v488
    %585 = vmatmul.bf16.gmra.mxu0 %v351
    %v586 = vpop.f32.mrf.mxu0
    %v587 = vadd.f32 %v388, %v586
    %v588 = vpop.f32.mrf.mxu0
    %589 = vdwg.mxu0
    %590 = vmatpush.bf16.msra.mxu0 %v518
    %591 = vmatpush.bf16.msra.mxu0 %v516
    %592 = vmatpush.bf16.msra.mxu0 %v514
    %593 = vmatpush.bf16.msra.mxu0 %v512
    %594 = vmatpush.bf16.msra.mxu0 %v510
    %595 = vmatpush.bf16.msra.mxu0 %v508
    %596 = vmatpush.bf16.msra.mxu0 %v506
    %597 = vmatpush.bf16.msra.mxu0 %v504
    %598 = vmatmul.bf16.gmra.mxu0 %v352
    %v599 = vpop.f32.mrf.mxu0
    %v600 = vadd.f32 %v587, %v599
    %v601 = vpop.f32.mrf.mxu0
    %602 = vdwg.mxu0
    %v603 = vmax.f32 %v574, 0.0
    %v604 = vmax.f32 %v600, 0.0
    %v605 = vpack.c.bf16 %v603, %v603
    %v606 = vpack.c.bf16 %v604, %v604
    %v607 = vld [vmem:[%s13] sm:$0xf]
    %v608 = vld [vmem:[%s13 + $0x4] sm:$0xf]
    %v609 = vld [vmem:[%s13 + $0x8] sm:$0xf]
    %v610 = vld [vmem:[%s13 + $0xc] sm:$0xf]
    %v611 = vld [vmem:[%s13 + $0x10] sm:$0xf]
    %v612 = vld [vmem:[%s13 + $0x14] sm:$0xf]
    %v613 = vld [vmem:[%s13 + $0x18] sm:$0xf]
    %v614 = vld [vmem:[%s13 + $0x1c] sm:$0xf]
    %v615 = vld [vmem:[%s13 + $0x20] sm:$0xf]
    %v616 = vld [vmem:[%s13 + $0x24] sm:$0xf]
    %v617 = vld [vmem:[%s13 + $0x28] sm:$0xf]
    %v618 = vld [vmem:[%s13 + $0x2c] sm:$0xf]
    %v619 = vld [vmem:[%s13 + $0x30] sm:$0xf]
    %v620 = vld [vmem:[%s13 + $0x34] sm:$0xf]
    %v621 = vld [vmem:[%s13 + $0x38] sm:$0xf]
    %v622 = vld [vmem:[%s13 + $0x3c] sm:$0xf]
    %v623 = vld [vmem:[%s13 + $0x40] sm:$0xf]
    %v624 = vld [vmem:[%s13 + $0x44] sm:$0xf]
    %v625 = vld [vmem:[%s13 + $0x48] sm:$0xf]
    %v626 = vld [vmem:[%s13 + $0x4c] sm:$0xf]
    %v627 = vld [vmem:[%s13 + $0x50] sm:$0xf]
    %v628 = vld [vmem:[%s13 + $0x54] sm:$0xf]
    %v629 = vld [vmem:[%s13 + $0x58] sm:$0xf]
    %v630 = vld [vmem:[%s13 + $0x5c] sm:$0xf]
    %v631 = vld [vmem:[%s13 + $0x60] sm:$0xf]
    %v632 = vld [vmem:[%s13 + $0x64] sm:$0xf]
    %v633 = vld [vmem:[%s13 + $0x68] sm:$0xf]
    %v634 = vld [vmem:[%s13 + $0x6c] sm:$0xf]
    %v635 = vld [vmem:[%s13 + $0x70] sm:$0xf]
    %v636 = vld [vmem:[%s13 + $0x74] sm:$0xf]
    %v637 = vld [vmem:[%s13 + $0x78] sm:$0xf]
    %v638 = vld [vmem:[%s13 + $0x7c] sm:$0xf]
    %v639 = vld [vmem:[%s14] sm:$0x1]
    %v641 = vperm.slane %v639, 0
    %v675 = vunpack.c.l.b16 %v607
    %v676 = vunpack.c.l.b16 %v608
    %v677 = vunpack.c.l.b16 %v609
    %v678 = vunpack.c.l.b16 %v610
    %v679 = vunpack.c.l.b16 %v611
    %v680 = vunpack.c.l.b16 %v612
    %v681 = vunpack.c.l.b16 %v613
    %v682 = vunpack.c.l.b16 %v614
    %v683 = vunpack.c.l.b16 %v615
    %v684 = vunpack.c.l.b16 %v616
    %v685 = vunpack.c.l.b16 %v617
    %v686 = vunpack.c.l.b16 %v618
    %v687 = vunpack.c.l.b16 %v619
    %v688 = vunpack.c.l.b16 %v620
    %v689 = vunpack.c.l.b16 %v621
    %v690 = vunpack.c.l.b16 %v622
    %v691 = vunpack.c.l.b16 %v623
    %v692 = vunpack.c.l.b16 %v624
    %v693 = vunpack.c.l.b16 %v625
    %v694 = vunpack.c.l.b16 %v626
    %v695 = vunpack.c.l.b16 %v627
    %v696 = vunpack.c.l.b16 %v628
    %v697 = vunpack.c.l.b16 %v629
    %v698 = vunpack.c.l.b16 %v630
    %v699 = vunpack.c.l.b16 %v631
    %v700 = vunpack.c.l.b16 %v632
    %v701 = vunpack.c.l.b16 %v633
    %v702 = vunpack.c.l.b16 %v634
    %v703 = vunpack.c.l.b16 %v635
    %v704 = vunpack.c.l.b16 %v636
    %v705 = vunpack.c.l.b16 %v637
    %v706 = vunpack.c.l.b16 %v638
    %v707 = vpack.c.b16 %v676, %v675
    %v708 = vpack.c.b16 %v678, %v677
    %v709 = vpack.c.b16 %v680, %v679
    %v710 = vpack.c.b16 %v682, %v681
    %v711 = vpack.c.b16 %v684, %v683
    %v712 = vpack.c.b16 %v686, %v685
    %v713 = vpack.c.b16 %v688, %v687
    %v714 = vpack.c.b16 %v690, %v689
    %v715 = vpack.c.b16 %v692, %v691
    %v716 = vpack.c.b16 %v694, %v693
    %v717 = vpack.c.b16 %v696, %v695
    %v718 = vpack.c.b16 %v698, %v697
    %v719 = vpack.c.b16 %v700, %v699
    %v720 = vpack.c.b16 %v702, %v701
    %v721 = vpack.c.b16 %v704, %v703
    %v722 = vpack.c.b16 %v706, %v705
    %739 = vmatpush.bf16.msra.mxu0 %v714
    %740 = vmatpush.bf16.msra.mxu0 %v713
    %741 = vmatpush.bf16.msra.mxu0 %v712
    %742 = vmatpush.bf16.msra.mxu0 %v711
    %743 = vmatpush.bf16.msra.mxu0 %v710
    %744 = vmatpush.bf16.msra.mxu0 %v709
    %745 = vmatpush.bf16.msra.mxu0 %v708
    %746 = vmatpush.bf16.msra.mxu0 %v707
    %747 = vmatmul.bf16.gmra.mxu0 %v605
    %v748 = vpop.f32.mrf.mxu0
    %v749 = vadd.f32 %v641, %v748
    %v750 = vpop.f32.mrf.mxu0
    %751 = vdwg.mxu0
    %752 = vmatpush.bf16.msra.mxu0 %v722
    %753 = vmatpush.bf16.msra.mxu0 %v721
    %754 = vmatpush.bf16.msra.mxu0 %v720
    %755 = vmatpush.bf16.msra.mxu0 %v719
    %756 = vmatpush.bf16.msra.mxu0 %v718
    %757 = vmatpush.bf16.msra.mxu0 %v717
    %758 = vmatpush.bf16.msra.mxu0 %v716
    %759 = vmatpush.bf16.msra.mxu0 %v715
    %760 = vmatmul.bf16.gmra.mxu0 %v606
    %v761 = vpop.f32.mrf.mxu0
    %v762 = vadd.f32 %v749, %v761
    %v763 = vpop.f32.mrf.mxu0
    %764 = vdwg.mxu0
    %765 = vst [vmem:[#allocation2] sm:$0x3] %v762
    // Predicated region
    $region62: #{mosoftq_forward.1} parent=1 // pred_check
      _
    $region63: #{mosoftq_forward.1} parent=1 // pred_check_branch
      %767 = sbr.rel (0) target = $region65
    $region64: #{mosoftq_forward.1} parent=1 // pred_region
      %769 = vsyncadd [#allocation3], 0
      %s771 = sshll.u32 [#allocation2], 4
      %s772 = int_to_ptr.vmem [resolvable:$true] %s771
      %s773 = sshll.u32 %s15, 4
      %s774 = int_to_ptr.hbm [resolvable:$true] %s773
      %776 = dma.vmem_to_hbm [thread:$0]  %s772, 32, %s774, [#allocation3]
    $region65: #{mosoftq_forward.1} parent=1 // pred_fallthru
      _
    // Predicated region
    $region66: #{mosoftq_forward.1} parent=1 // pred_check
      _
    $region67: #{mosoftq_forward.1} parent=1 // pred_check_branch
      %778 = sbr.rel (0) target = $region69
    $region68: #{mosoftq_forward.1} parent=1 // pred_region
      %780 = dma.done [#allocation3], 32
    $region69: #{mosoftq_forward.1} parent=1 // pred_fallthru
      _
    %781 = vsyncpa [#allocation3], 1

</llo_original>
